<compile_context>
chip_gen: v7x
topology: tpu7x:2x2x1
jax: 0.10.0
libtpu: 0.0.40
codegen_flags: <defaults>
</compile_context>

<pallas_src>
from functools import partial

import jax
import jax.numpy as jnp
from jax.experimental import pallas as pl
from jax.experimental.pallas import tpu as pltpu

NORM_EPS = 1e-5


def _round_up(n, m):
    return (n + m - 1) // m * m


def _pick_row_tile(R):
    """1024-row tiles on v6e/v7x (amortize per-step overhead vs HBM BW);
    256 on v5e (MXU-bound at these dims, smaller default scoped VMEM)."""
    try:
        kind = jax.devices()[0].device_kind.lower()
    except Exception:
        kind = ""
    big = 256 if "v5" in kind else 1024
    return R if R <= big else big


def _down_mlp_kernel(x_ref, w1_ref, vec_ref, w2_ref, o_ref,
                     *, c_pad, inv_d, eps, mxu_dtype):
    """Fused MaxPool1d(2) + Linear + RMSNorm + SiLU + Linear for one row tile.

    x_ref  : (TR, 2*C_pad) f32 — rows = flattened (batch, pooled position);
             the two pooling partners occupy lanes [0:C_pad] / [C_pad:].
    w1_ref : (C_pad, D_pad) bf16
    vec_ref: (8, D_pad) f32 — row 0 = b1, row 1 = RMSNorm gain, row 2 = b2.
    w2_ref : (D_pad, D_pad) bf16
    o_ref  : (TR, D_pad) out_dtype (bf16 by default)
    """
    xb = x_ref[...]                                        # one contiguous f32 load
    # MaxPool1d(kernel=2, stride=2) over the sequence axis -> single VPU max (f32).
    pooled = jnp.maximum(xb[:, :c_pad], xb[:, c_pad:])     # (TR, C_pad)

    vecs = vec_ref[...]
    b1 = vecs[0:1, :]
    g = vecs[1:2, :]
    b2 = vecs[2:3, :]

    # Linear 1 (MXU, bf16 operands, f32 accumulate). Cast AFTER pooling.
    h = jnp.dot(pooled.astype(mxu_dtype), w1_ref[...],
                preferred_element_type=jnp.float32) + b1

    # RMSNorm in f32. Padded lanes of h are exactly 0 (zero-padded w1 cols / b1),
    # so the sum over D_pad equals the sum over the true D; divide by true D.
    ms = jnp.sum(h * h, axis=-1, keepdims=True) * inv_d
    h = h * jax.lax.rsqrt(ms + eps) * g

    # SiLU in f32.
    h = h * jax.nn.sigmoid(h)

    # Linear 2 (MXU).
    out = jnp.dot(h.astype(mxu_dtype), w2_ref[...],
                  preferred_element_type=jnp.float32) + b2
    o_ref[...] = out.astype(o_ref.dtype)


def down_block_forward(x, w1, b1, g, w2, b2, *, eps=NORM_EPS,
                       mxu_dtype=jnp.bfloat16, out_dtype=jnp.bfloat16):
    """x: (B, L, C) float32.  Returns (B, L//2, D) in `out_dtype` (down + mlp)."""
    B, L, C = x.shape
    D = w1.shape[1]

    # MaxPool1d floors: an odd trailing frame is dropped (matches PyTorch).
    L2 = (L // 2) * 2
    if L2 != L:
        x = x[:, :L2, :]
    Lh = L2 // 2
    R = B * Lh                      # flattened output rows

    LANE = 128
    C_pad = _round_up(C, LANE)
    D_pad = _round_up(D, LANE)

    # --- layout plumbing only; x stays f32 (no wrapper astype pass) ---------
    x = x.astype(jnp.float32)
    if C_pad != C:                  # one pad pass only when C is not lane-aligned
        x = jnp.pad(x, ((0, 0), (0, 0), (0, C_pad - C)))
    xr = x.reshape(R, 2 * C_pad)    # pure contiguous reshape: pooling partners
                                    # (2l, 2l+1) land in adjacent 128-lane groups

    def pad2(a, rows, cols):
        return jnp.pad(a, ((0, rows - a.shape[0]), (0, cols - a.shape[1])))

    w1p = pad2(w1, C_pad, D_pad).astype(mxu_dtype)
    w2p = pad2(w2, D_pad, D_pad).astype(mxu_dtype)

    # Pack b1 / gain / b2 into one 8-sublane block -> one DMA, one buffer.
    vecs = jnp.zeros((8, D_pad), jnp.float32)
    vecs = vecs.at[0, :D].set(b1.astype(jnp.float32))
    vecs = vecs.at[1, :D].set(g.astype(jnp.float32))
    vecs = vecs.at[2, :D].set(b2.astype(jnp.float32))

    TR = _pick_row_tile(R)
    grid = (pl.cdiv(R, TR),)        # partial last block is masked by Pallas
    const = lambda i: (0, 0)        # constant block index => fetched once

    itemsize_w = jnp.dtype(mxu_dtype).itemsize
    itemsize_o = jnp.dtype(out_dtype).itemsize
    cost = pl.CostEstimate(
        flops=2 * R * D * (C + D) + 8 * R * D,
        transcendentals=R * D,                       # sigmoid
        bytes_accessed=(R * 2 * C_pad * 4            # x (f32)
                        + (C_pad + D_pad) * D_pad * itemsize_w   # w1 + w2
                        + 8 * D_pad * 4              # packed vectors
                        + R * D_pad * itemsize_o),   # output
    )

    kernel = partial(_down_mlp_kernel, c_pad=C_pad, inv_d=1.0 / D, eps=eps,
                     mxu_dtype=mxu_dtype)

    out = pl.pallas_call(
        kernel,
        out_shape=jax.ShapeDtypeStruct((R, D_pad), out_dtype),
        grid=grid,
        in_specs=[
            pl.BlockSpec((TR, 2 * C_pad), lambda i: (i, 0)),
            pl.BlockSpec((C_pad, D_pad), const),
            pl.BlockSpec((8, D_pad), const),
            pl.BlockSpec((D_pad, D_pad), const),
        ],
        out_specs=pl.BlockSpec((TR, D_pad), lambda i: (i, 0)),
        compiler_params=pltpu.CompilerParams(
            dimension_semantics=("parallel",),
        ),
        cost_estimate=cost,
    )(xr, w1p, vecs, w2p)

    if D_pad != D:                  # lane slice only when D is not 128-aligned
        out = out[:, :D]
    return out.reshape(B, Lh, D)


def _reference(x, w1, b1, g, w2, b2, matmul_dtype=jnp.float32):
    """Pure-JAX reference of the PyTorch forward (down + mlp)."""
    cd = matmul_dtype
    pooled = jnp.maximum(x[:, 0::2, :], x[:, 1::2, :])             # MaxPool1d(2), f32
    h = jnp.dot(pooled.astype(cd), w1.astype(cd),
                preferred_element_type=jnp.float32) + b1            # Linear
    h = h * jax.lax.rsqrt(jnp.mean(h * h, -1, keepdims=True) + NORM_EPS) * g
    h = h * jax.nn.sigmoid(h)                                       # SiLU
    return jnp.dot(h.astype(cd), w2.astype(cd),
                   preferred_element_type=jnp.float32) + b2         # Linear


if __name__ == "__main__":
    # Small shapes consistent with the module: batch=2, seqlen=16, dims=32.
    B, L, C, D = 2, 16, 32, 32

    key = jax.random.PRNGKey(0)
    kx, kw1, kb1, kw2, kb2 = jax.random.split(key, 5)

    x = jax.random.normal(kx, (B, L, C), dtype=jnp.float32)

    # Deterministic synthetic parameters (shapes from nn.Linear / RMSNorm).
    w1 = jax.random.normal(kw1, (C, D), dtype=jnp.float32) * (1.0 / jnp.sqrt(C))
    b1 = jax.random.normal(kb1, (D,), dtype=jnp.float32) * 0.01
    g = jnp.ones((D,), dtype=jnp.float32)          # RMSNorm weight
    w2 = jax.random.normal(kw2, (D, D), dtype=jnp.float32) * (1.0 / jnp.sqrt(D))
    b2 = jax.random.normal(kb2, (D,), dtype=jnp.float32) * 0.01

    out = down_block_forward(x, w1, b1, g, w2, b2)
    out = jax.block_until_ready(out)

    assert out.shape == (B, L // 2, D), out.shape
    assert out.dtype == jnp.bfloat16, out.dtype
    out_f32 = out.astype(jnp.float32)
    assert bool(jnp.all(jnp.isfinite(out_f32)))

    # Precision-matched reference (bf16 MXU operands, f32 accumulate/elementwise).
    ref_bf16 = _reference(x, w1, b1, g, w2, b2, matmul_dtype=jnp.bfloat16)
    assert jnp.allclose(out_f32, ref_bf16, rtol=2e-2, atol=2e-2), \
        "mismatch vs precision-matched reference"

    # Loose sanity check against the full-f32 reference (bf16 rounding only).
    ref_f32 = _reference(x, w1, b1, g, w2, b2, matmul_dtype=jnp.float32)
    assert jnp.allclose(out_f32, ref_f32, rtol=5e-2, atol=5e-2), \
        "mismatch vs f32 reference"

    print("KERNEL_OK")
</pallas_src>

<mosaic_0001>
module attributes {stable_mosaic.version = 11 : i64} {
  func.func @_down_mlp_kernel(%arg0: i32, %arg1: memref<16x256xf32, #tpu.memory_space<vmem>>, %arg2: memref<128x128xbf16, #tpu.memory_space<vmem>>, %arg3: memref<8x128xf32, #tpu.memory_space<vmem>>, %arg4: memref<128x128xbf16, #tpu.memory_space<vmem>>, %arg5: memref<16x128xbf16, #tpu.memory_space<vmem>>) attributes {dimension_semantics = [#tpu.dimension_semantics<parallel>], iteration_bounds = array<i64: 1>, scalar_prefetch = 0 : i64, scratch_operands = 0 : i64, tpu.core_type = #tpu.core_type<tc>, window_params = [{transform_indices = @transform_0, window_bounds = array<i64: 16, 256>}, {pipeline_mode = #tpu.pipeline_mode<synchronous>, transform_indices = @transform_1, window_bounds = array<i64: 128, 128>}, {pipeline_mode = #tpu.pipeline_mode<synchronous>, transform_indices = @transform_2, window_bounds = array<i64: 8, 128>}, {pipeline_mode = #tpu.pipeline_mode<synchronous>, transform_indices = @transform_3, window_bounds = array<i64: 128, 128>}, {transform_indices = @transform_4, window_bounds = array<i64: 16, 128>}]} {
    %c0 = arith.constant 0 : index
    %c0_0 = arith.constant 0 : index
    %0 = vector.load %arg1[%c0, %c0_0] : memref<16x256xf32, #tpu.memory_space<vmem>>, vector<16x256xf32>
    %1 = vector.extract_strided_slice %0 {offsets = [0, 0], sizes = [16, 128], strides = [1, 1]} : vector<16x256xf32> to vector<16x128xf32>
    %2 = vector.extract_strided_slice %0 {offsets = [0, 128], sizes = [16, 128], strides = [1, 1]} : vector<16x256xf32> to vector<16x128xf32>
    %3 = arith.maximumf %1, %2 : vector<16x128xf32>
    %c0_1 = arith.constant 0 : index
    %c0_2 = arith.constant 0 : index
    %4 = vector.load %arg3[%c0_1, %c0_2] : memref<8x128xf32, #tpu.memory_space<vmem>>, vector<8x128xf32>
    %5 = vector.extract_strided_slice %4 {offsets = [0, 0], sizes = [1, 128], strides = [1, 1]} : vector<8x128xf32> to vector<1x128xf32>
    %6 = vector.extract_strided_slice %4 {offsets = [1, 0], sizes = [1, 128], strides = [1, 1]} : vector<8x128xf32> to vector<1x128xf32>
    %7 = vector.extract_strided_slice %4 {offsets = [2, 0], sizes = [1, 128], strides = [1, 1]} : vector<8x128xf32> to vector<1x128xf32>
    %8 = arith.truncf %3 : vector<16x128xf32> to vector<16x128xbf16>
    %c0_3 = arith.constant 0 : index
    %c0_4 = arith.constant 0 : index
    %9 = vector.load %arg2[%c0_3, %c0_4] : memref<128x128xbf16, #tpu.memory_space<vmem>>, vector<128x128xbf16>
    %cst = arith.constant dense<0.000000e+00> : vector<16x128xf32>
    %10 = tpu.matmul %8, %9, %cst {dimension_numbers = #tpu.dot_dimension_numbers<[1], [0], [0], [1], [0, 0, 1, 1], [], []>} : vector<16x128xbf16>, vector<128x128xbf16>, vector<16x128xf32> -> vector<16x128xf32>
    %11 = vector.broadcast %5 : vector<1x128xf32> to vector<16x128xf32>
    %12 = arith.addf %10, %11 : vector<16x128xf32>
    %13 = arith.mulf %12, %12 : vector<16x128xf32>
    %cst_5 = arith.constant dense<0.000000e+00> : vector<16xf32>
    %14 = vector.multi_reduction <add>, %13, %cst_5 [1] : vector<16x128xf32> to vector<16xf32>
    %15 = vector.shape_cast %14 : vector<16xf32> to vector<16x1xf32>
    %cst_6 = arith.constant 3.125000e-02 : f32
    %16 = vector.broadcast %cst_6 : f32 to vector<16x1xf32>
    %17 = arith.mulf %15, %16 : vector<16x1xf32>
    %cst_7 = arith.constant 9.99999974E-6 : f32
    %18 = vector.broadcast %cst_7 : f32 to vector<16x1xf32>
    %19 = arith.addf %17, %18 : vector<16x1xf32>
    %20 = math.rsqrt %19 : vector<16x1xf32>
    %21 = vector.broadcast %20 : vector<16x1xf32> to vector<16x128xf32>
    %22 = arith.mulf %12, %21 : vector<16x128xf32>
    %23 = vector.broadcast %6 : vector<1x128xf32> to vector<16x128xf32>
    %24 = arith.mulf %22, %23 : vector<16x128xf32>
    %25 = arith.negf %24 : vector<16x128xf32>
    %26 = math.exp %25 : vector<16x128xf32>
    %cst_8 = arith.constant 1.000000e+00 : f32
    %27 = vector.broadcast %cst_8 : f32 to vector<16x128xf32>
    %28 = arith.addf %27, %26 : vector<16x128xf32>
    %29 = arith.divf %27, %28 : vector<16x128xf32>
    %30 = arith.mulf %24, %29 : vector<16x128xf32>
    %31 = arith.truncf %30 : vector<16x128xf32> to vector<16x128xbf16>
    %c0_9 = arith.constant 0 : index
    %c0_10 = arith.constant 0 : index
    %32 = vector.load %arg4[%c0_9, %c0_10] : memref<128x128xbf16, #tpu.memory_space<vmem>>, vector<128x128xbf16>
    %cst_11 = arith.constant dense<0.000000e+00> : vector<16x128xf32>
    %33 = tpu.matmul %31, %32, %cst_11 {dimension_numbers = #tpu.dot_dimension_numbers<[1], [0], [0], [1], [0, 0, 1, 1], [], []>} : vector<16x128xbf16>, vector<128x128xbf16>, vector<16x128xf32> -> vector<16x128xf32>
    %34 = vector.broadcast %7 : vector<1x128xf32> to vector<16x128xf32>
    %35 = arith.addf %33, %34 : vector<16x128xf32>
    %36 = arith.truncf %35 : vector<16x128xf32> to vector<16x128xbf16>
    %c0_12 = arith.constant 0 : index
    %c0_13 = arith.constant 0 : index
    %37 = vector.load %arg5[%c0_12, %c0_13] : memref<16x128xbf16, #tpu.memory_space<vmem>>, vector<16x128xbf16>
    tpu.vector_store %arg5[%c0_12, %c0_13], %36 {strides = array<i32>} : memref<16x128xbf16, #tpu.memory_space<vmem>>, vector<16x128xbf16>,
    return
  }
  func.func @transform_0(%arg0: i32) -> (i32, i32) {
    %c0_i32 = arith.constant 0 : i32
    %c0_i32_0 = arith.constant 0 : i32
    return %arg0, %c0_i32 : i32, i32
  }
  func.func @transform_1(%arg0: i32) -> (i32, i32) {
    %c0_i32 = arith.constant 0 : i32
    %c0_i32_0 = arith.constant 0 : i32
    %c0_i32_1 = arith.constant 0 : i32
    return %c0_i32, %c0_i32_0 : i32, i32
  }
  func.func @transform_2(%arg0: i32) -> (i32, i32) {
    %c0_i32 = arith.constant 0 : i32
    %c0_i32_0 = arith.constant 0 : i32
    %c0_i32_1 = arith.constant 0 : i32
    return %c0_i32, %c0_i32_0 : i32, i32
  }
  func.func @transform_3(%arg0: i32) -> (i32, i32) {
    %c0_i32 = arith.constant 0 : i32
    %c0_i32_0 = arith.constant 0 : i32
    %c0_i32_1 = arith.constant 0 : i32
    return %c0_i32, %c0_i32_0 : i32, i32
  }
  func.func @transform_4(%arg0: i32) -> (i32, i32) {
    %c0_i32 = arith.constant 0 : i32
    %c0_i32_0 = arith.constant 0 : i32
    return %arg0, %c0_i32 : i32, i32
  }
}

</mosaic_0001>

<llo_original>
// kernel: tpu_custom_call.1
$region0: #{tpu_custom_call.1}
  #allocation0 [shape = 'u32[]', space=smem, size = 0x4, offset = 0x4, fixed_abs, tag = 'smem constant byte address 0x4 - core index']
  #allocation1 [shape = 'u32[144,128]{1,0:T(1,128)}', space=vmem, size = 0x12000, scoped, tag = 'internal scratch']
  %s0 = inlined_call_operand.hbm [shape: f32[16,256], index: 0, kind: input, shape index: {}]
  %s1 = inlined_call_operand.hbm [shape: bf16[128,128], index: 1, kind: input, shape index: {}]
  %s2 = inlined_call_operand.hbm [shape: f32[8,128], index: 2, kind: input, shape index: {}]
  %s3 = inlined_call_operand.hbm [shape: bf16[128,128], index: 3, kind: input, shape index: {}]
  %s4 = inlined_call_operand.hbm [shape: bf16[16,128], index: 4, kind: output, shape index: {}]
  %s5 = sld [smem:[#allocation0]]
  $region42: #{tpu_custom_call.1} parent=0
    _
  %s7 = ssub.s32 1, %s5
  %s8 = scalar_select 0, %s7, %s5
  $region1: #{tpu_custom_call.1} parent=0
    #allocation2 [shape = 'u8[16384]{0}', space=vmem, size = 0x4000, scoped, tag = 'input window, operand 0, single buffered']
    #allocation3 [shape = 's32[1]{0}', space=sflag, size = 0x4, scoped, tag = 'scoped memory for tpu_custom_call.1']
    #allocation4 [shape = 's32[1]{0}', space=sflag, size = 0x4, scoped, tag = 'scoped memory for tpu_custom_call.1']
    #allocation5 [shape = 'u8[32768]{0}', space=vmem, size = 0x8000, scoped, tag = 'input window, operand 1, single buffered']
    #allocation6 [shape = 's32[1]{0}', space=sflag, size = 0x4, scoped, tag = 'scoped memory for tpu_custom_call.1']
    #allocation7 [shape = 'u8[4096]{0}', space=vmem, size = 0x1000, scoped, tag = 'input window, operand 2, single buffered']
    #allocation8 [shape = 'u8[32768]{0}', space=vmem, size = 0x8000, scoped, tag = 'input window, operand 3, single buffered']
    #allocation9 [shape = 's32[1]{0}', space=sflag, size = 0x4, scoped, tag = 'scoped memory for tpu_custom_call.1']
    #allocation10 [shape = 'u8[4096]{0}', space=vmem, size = 0x1000, scoped, tag = 'output window, operand 0, single buffered']
    %9 = vsyncpa [#allocation3], 0
    %10 = vsyncpa [#allocation6], 0
    %11 = vsyncpa [#allocation9], 0
    %12 = vsyncpa [#allocation4], 0
    // Predicated region
    $region2: #{tpu_custom_call.1} parent=1 // pred_check
      _
    $region3: #{tpu_custom_call.1} parent=1 // pred_check_branch
      %14 = sbr.rel (0) target = $region5
    $region4: #{tpu_custom_call.1} parent=1 // pred_region
      %s16 = ssub.s32 512, 512
      %17 = vsyncadd [#allocation3], %s16
      %s18 = sshll.u32 [#allocation2], 4
      %s19 = int_to_ptr.vmem [resolvable:$true] %s18
      %24 = dma.hbm_to_vmem [thread:$0]  %s0, 512, %s19, [#allocation3], 256, 256, 16
    $region5: #{tpu_custom_call.1} parent=1 // pred_fallthru
      _
    // Predicated region
    $region6: #{tpu_custom_call.1} parent=1 // pred_check
      _
    $region7: #{tpu_custom_call.1} parent=1 // pred_check_branch
      %26 = sbr.rel (0) target = $region9
    $region8: #{tpu_custom_call.1} parent=1 // pred_region
      %s28 = ssub.s32 1024, 1024
      %29 = vsyncadd [#allocation6], %s28
      %s30 = sshll.u32 [#allocation5], 4
      %s31 = int_to_ptr.vmem [resolvable:$true] %s30
      %36 = dma.hbm_to_vmem [thread:$0]  %s1, 1024, %s31, [#allocation6], 64, 64, 4
    $region9: #{tpu_custom_call.1} parent=1 // pred_fallthru
      _
    // Predicated region
    $region10: #{tpu_custom_call.1} parent=1 // pred_check
      _
    $region11: #{tpu_custom_call.1} parent=1 // pred_check_branch
      %38 = sbr.rel (0) target = $region13
    $region12: #{tpu_custom_call.1} parent=1 // pred_region
      %s40 = ssub.s32 128, 128
      %41 = vsyncadd [#allocation6], %s40
      %s43 = sshll.u32 [#allocation7], 4
      %s44 = int_to_ptr.vmem [resolvable:$true] %s43
      %46 = dma.hbm_to_vmem [thread:$0]  %s2, 128, %s44, [#allocation6]
    $region13: #{tpu_custom_call.1} parent=1 // pred_fallthru
      _
    // Predicated region
    $region14: #{tpu_custom_call.1} parent=1 // pred_check
      _
    $region15: #{tpu_custom_call.1} parent=1 // pred_check_branch
      %48 = sbr.rel (0) target = $region17
    $region16: #{tpu_custom_call.1} parent=1 // pred_region
      %s50 = ssub.s32 1024, 1024
      %51 = vsyncadd [#allocation9], %s50
      %s52 = sshll.u32 [#allocation8], 4
      %s53 = int_to_ptr.vmem [resolvable:$true] %s52
      %58 = dma.hbm_to_vmem [thread:$0]  %s3, 1024, %s53, [#allocation9], 64, 64, 4
    $region17: #{tpu_custom_call.1} parent=1 // pred_fallthru
      _
    // Predicated region
    $region18: #{tpu_custom_call.1} parent=1 // pred_check
      _
    $region19: #{tpu_custom_call.1} parent=1 // pred_check_branch
      %60 = sbr.rel (0) target = $region21
    $region20: #{tpu_custom_call.1} parent=1 // pred_region
      %61 = dma.done [#allocation3], 512
    $region21: #{tpu_custom_call.1} parent=1 // pred_fallthru
      _
    // Predicated region
    $region22: #{tpu_custom_call.1} parent=1 // pred_check
      _
    $region23: #{tpu_custom_call.1} parent=1 // pred_check_branch
      %63 = sbr.rel (0) target = $region25
    $region24: #{tpu_custom_call.1} parent=1 // pred_region
      %64 = dma.done [#allocation6], 1024
    $region25: #{tpu_custom_call.1} parent=1 // pred_fallthru
      _
    // Predicated region
    $region26: #{tpu_custom_call.1} parent=1 // pred_check
      _
    $region27: #{tpu_custom_call.1} parent=1 // pred_check_branch
      %66 = sbr.rel (0) target = $region29
    $region28: #{tpu_custom_call.1} parent=1 // pred_region
      %67 = dma.done [#allocation6], 128
    $region29: #{tpu_custom_call.1} parent=1 // pred_fallthru
      _
    // Predicated region
    $region30: #{tpu_custom_call.1} parent=1 // pred_check
      _
    $region31: #{tpu_custom_call.1} parent=1 // pred_check_branch
      %69 = sbr.rel (0) target = $region33
    $region32: #{tpu_custom_call.1} parent=1 // pred_region
      %70 = dma.done [#allocation9], 1024
    $region33: #{tpu_custom_call.1} parent=1 // pred_fallthru
      _
    %v72 = vld [vmem:[#allocation2] sm:$0xff]
    %v73 = vld [vmem:[#allocation2 + $0x8] sm:$0xff]
    %v74 = vld [vmem:[#allocation2 + $0x10] sm:$0xff]
    %v75 = vld [vmem:[#allocation2 + $0x18] sm:$0xff]
    %v76 = vmax.f32 %v72, %v73
    %v77 = vmax.f32 %v74, %v75
    %v78 = vld [vmem:[#allocation7] sm:$0xff]
    %v79 = vpack.c.bf16 %v77, %v76
    %v80 = vld [vmem:[#allocation5] sm:$0xf]
    %v81 = vld [vmem:[#allocation5 + $0x4] sm:$0xf]
    %v82 = vld [vmem:[#allocation5 + $0x8] sm:$0xf]
    %v83 = vld [vmem:[#allocation5 + $0xc] sm:$0xf]
    %v84 = vld [vmem:[#allocation5 + $0x10] sm:$0xf]
    %v85 = vld [vmem:[#allocation5 + $0x14] sm:$0xf]
    %v86 = vld [vmem:[#allocation5 + $0x18] sm:$0xf]
    %v87 = vld [vmem:[#allocation5 + $0x1c] sm:$0xf]
    %v88 = vld [vmem:[#allocation5 + $0x20] sm:$0xf]
    %v89 = vld [vmem:[#allocation5 + $0x24] sm:$0xf]
    %v90 = vld [vmem:[#allocation5 + $0x28] sm:$0xf]
    %v91 = vld [vmem:[#allocation5 + $0x2c] sm:$0xf]
    %v92 = vld [vmem:[#allocation5 + $0x30] sm:$0xf]
    %v93 = vld [vmem:[#allocation5 + $0x34] sm:$0xf]
    %v94 = vld [vmem:[#allocation5 + $0x38] sm:$0xf]
    %v95 = vld [vmem:[#allocation5 + $0x3c] sm:$0xf]
    %v96 = vlaneseq
    %v97 = vshrl.u32 %v96, 7
    %v98 = vsub.s32 0, %v97
    %v99 = vrot.slane %v78, %v98
    %v116 = vunpack.c.l.b16 %v80
    %v117 = vunpack.c.l.b16 %v81
    %v118 = vunpack.c.l.b16 %v82
    %v119 = vunpack.c.l.b16 %v83
    %v120 = vunpack.c.l.b16 %v84
    %v121 = vunpack.c.l.b16 %v85
    %v122 = vunpack.c.l.b16 %v86
    %v123 = vunpack.c.l.b16 %v87
    %v124 = vunpack.c.l.b16 %v88
    %v125 = vunpack.c.l.b16 %v89
    %v126 = vunpack.c.l.b16 %v90
    %v127 = vunpack.c.l.b16 %v91
    %v128 = vunpack.c.l.b16 %v92
    %v129 = vunpack.c.l.b16 %v93
    %v130 = vunpack.c.l.b16 %v94
    %v131 = vunpack.c.l.b16 %v95
    %v132 = vpack.c.b16 %v117, %v116
    %v133 = vpack.c.b16 %v119, %v118
    %v134 = vpack.c.b16 %v121, %v120
    %v135 = vpack.c.b16 %v123, %v122
    %v136 = vpack.c.b16 %v125, %v124
    %v137 = vpack.c.b16 %v127, %v126
    %v138 = vpack.c.b16 %v129, %v128
    %v139 = vpack.c.b16 %v131, %v130
    %148 = vmatprep.subr.bf16.mxu0 0
    %149 = vmatpush1.bf16.msra.mxu0 %v132
    %150 = vmatprep.subr.bf16.mxu0 0
    %151 = vmatpush1.bf16.msra.mxu0 %v133
    %152 = vmatprep.subr.bf16.mxu0 0
    %153 = vmatpush1.bf16.msra.mxu0 %v134
    %154 = vmatprep.subr.bf16.mxu0 0
    %155 = vmatpush1.bf16.msra.mxu0 %v135
    %156 = vmatprep.subr.bf16.mxu0 0
    %157 = vmatpush1.bf16.msra.mxu0 %v136
    %158 = vmatprep.subr.bf16.mxu0 0
    %159 = vmatpush1.bf16.msra.mxu0 %v137
    %160 = vmatprep.subr.bf16.mxu0 0
    %161 = vmatpush1.bf16.msra.mxu0 %v138
    %162 = vmatprep.subr.bf16.mxu0 0
    %163 = vmatpush1.bf16.msra.mxu0 %v139
    %164 = vmatprep.subr.bf16.mxu0 0
    %165 = vmatpush1.bf16.msra.mxu0 0
    %166 = vmatprep.subr.bf16.mxu0 0
    %167 = vmatpush1.bf16.msra.mxu0 0
    %168 = vmatprep.subr.bf16.mxu0 0
    %169 = vmatpush1.bf16.msra.mxu0 0
    %170 = vmatprep.subr.bf16.mxu0 0
    %171 = vmatpush1.bf16.msra.mxu0 0
    %172 = vmatprep.subr.bf16.mxu0 0
    %173 = vmatpush1.bf16.msra.mxu0 0
    %174 = vmatprep.subr.bf16.mxu0 0
    %175 = vmatpush1.bf16.msra.mxu0 0
    %176 = vmatprep.subr.bf16.mxu0 0
    %177 = vmatpush1.bf16.msra.mxu0 0
    %178 = vmatprep.subr.bf16.mxu0 0
    %179 = vmatpush1.bf16.msra.mxu0 0
    %180 = vmatprep.mubr.bf16.mxu0 0
    %181 = vmatmul.mubr.bf16.gmra.mrb[0].mxu0 %v79
    %v182 = vpop.f32.mrb[0].mxu0
    %v183 = vadd.f32 %v99, %v182
    %v184 = vpop.f32.mrb[0].mxu0
    %v185 = vpop.f32.mrb[0].mxu0
    %v186 = vadd.f32 %v99, %v185
    %v187 = vpop.f32.mrb[0].mxu0
    %188 = vdwg.mxu0
    %v189 = vmul.f32 %v183, %v183
    %v190 = vmul.f32 %v186, %v186
    %191 = vadd.xlane.f32.xlu0 %v189
    %v192 = vpop.xlane.xlu0 %191
    %193 = vadd.xlane.f32.xlu0 %v190
    %v194 = vpop.xlane.xlu0 %193
    %v195 = vmul.f32 %v192, 0.03125
    %v196 = vmul.f32 %v194, 0.03125
    %v197 = vadd.f32 %v195, 1e-05
    %v198 = vadd.f32 %v196, 1e-05
    %v199 = vrsqrt.pop %v197
    %v200 = vrsqrt.pop %v198
    %v201 = vmul.f32 %v183, %v199
    %v202 = vmul.f32 %v186, %v200
    %v203 = vlaneseq
    %v204 = vshrl.u32 %v203, 7
    %v205 = vsub.s32 1, %v204
    %v206 = vrot.slane %v78, %v205
    %v207 = vmul.f32 %v201, %v206
    %v208 = vmul.f32 %v202, %v206
    %v209 = vxor.u32 %v207, 2147483648
    %v210 = vxor.u32 %v208, 2147483648
    %v211 = vmul.f32 %v209, 1.442695
    %v212 = vpow.pop %v211
    %v213 = vmul.f32 %v210, 1.442695
    %v214 = vpow.pop %v213
    %v215 = vadd.f32 %v212, 1.0
    %v216 = vadd.f32 %v214, 1.0
    %v217 = vrcp.pop %v215
    %v218 = vmul.f32 1.0, %v217
    %v219 = vrcp.pop %v216
    %v220 = vmul.f32 1.0, %v219
    %v221 = vmul.f32 %v207, %v218
    %v222 = vmul.f32 %v208, %v220
    %v223 = vpack.c.bf16 %v222, %v221
    %v224 = vld [vmem:[#allocation8] sm:$0xf]
    %v225 = vld [vmem:[#allocation8 + $0x4] sm:$0xf]
    %v226 = vld [vmem:[#allocation8 + $0x8] sm:$0xf]
    %v227 = vld [vmem:[#allocation8 + $0xc] sm:$0xf]
    %v228 = vld [vmem:[#allocation8 + $0x10] sm:$0xf]
    %v229 = vld [vmem:[#allocation8 + $0x14] sm:$0xf]
    %v230 = vld [vmem:[#allocation8 + $0x18] sm:$0xf]
    %v231 = vld [vmem:[#allocation8 + $0x1c] sm:$0xf]
    %v232 = vld [vmem:[#allocation8 + $0x20] sm:$0xf]
    %v233 = vld [vmem:[#allocation8 + $0x24] sm:$0xf]
    %v234 = vld [vmem:[#allocation8 + $0x28] sm:$0xf]
    %v235 = vld [vmem:[#allocation8 + $0x2c] sm:$0xf]
    %v236 = vld [vmem:[#allocation8 + $0x30] sm:$0xf]
    %v237 = vld [vmem:[#allocation8 + $0x34] sm:$0xf]
    %v238 = vld [vmem:[#allocation8 + $0x38] sm:$0xf]
    %v239 = vld [vmem:[#allocation8 + $0x3c] sm:$0xf]
    %v240 = vlaneseq
    %v241 = vshrl.u32 %v240, 7
    %v242 = vsub.s32 2, %v241
    %v243 = vrot.slane %v78, %v242
    %v260 = vunpack.c.l.b16 %v224
    %v261 = vunpack.c.l.b16 %v225
    %v262 = vunpack.c.l.b16 %v226
    %v263 = vunpack.c.l.b16 %v227
    %v264 = vunpack.c.l.b16 %v228
    %v265 = vunpack.c.l.b16 %v229
    %v266 = vunpack.c.l.b16 %v230
    %v267 = vunpack.c.l.b16 %v231
    %v268 = vunpack.c.l.b16 %v232
    %v269 = vunpack.c.l.b16 %v233
    %v270 = vunpack.c.l.b16 %v234
    %v271 = vunpack.c.l.b16 %v235
    %v272 = vunpack.c.l.b16 %v236
    %v273 = vunpack.c.l.b16 %v237
    %v274 = vunpack.c.l.b16 %v238
    %v275 = vunpack.c.l.b16 %v239
    %v276 = vpack.c.b16 %v261, %v260
    %v277 = vpack.c.b16 %v263, %v262
    %v278 = vpack.c.b16 %v265, %v264
    %v279 = vpack.c.b16 %v267, %v266
    %v280 = vpack.c.b16 %v269, %v268
    %v281 = vpack.c.b16 %v271, %v270
    %v282 = vpack.c.b16 %v273, %v272
    %v283 = vpack.c.b16 %v275, %v274
    %292 = vmatprep.subr.bf16.mxu0 0
    %293 = vmatpush1.bf16.msra.mxu0 %v276
    %294 = vmatprep.subr.bf16.mxu0 0
    %295 = vmatpush1.bf16.msra.mxu0 %v277
    %296 = vmatprep.subr.bf16.mxu0 0
    %297 = vmatpush1.bf16.msra.mxu0 %v278
    %298 = vmatprep.subr.bf16.mxu0 0
    %299 = vmatpush1.bf16.msra.mxu0 %v279
    %300 = vmatprep.subr.bf16.mxu0 0
    %301 = vmatpush1.bf16.msra.mxu0 %v280
    %302 = vmatprep.subr.bf16.mxu0 0
    %303 = vmatpush1.bf16.msra.mxu0 %v281
    %304 = vmatprep.subr.bf16.mxu0 0
    %305 = vmatpush1.bf16.msra.mxu0 %v282
    %306 = vmatprep.subr.bf16.mxu0 0
    %307 = vmatpush1.bf16.msra.mxu0 %v283
    %308 = vmatprep.subr.bf16.mxu0 0
    %309 = vmatpush1.bf16.msra.mxu0 0
    %310 = vmatprep.subr.bf16.mxu0 0
    %311 = vmatpush1.bf16.msra.mxu0 0
    %312 = vmatprep.subr.bf16.mxu0 0
    %313 = vmatpush1.bf16.msra.mxu0 0
    %314 = vmatprep.subr.bf16.mxu0 0
    %315 = vmatpush1.bf16.msra.mxu0 0
    %316 = vmatprep.subr.bf16.mxu0 0
    %317 = vmatpush1.bf16.msra.mxu0 0
    %318 = vmatprep.subr.bf16.mxu0 0
    %319 = vmatpush1.bf16.msra.mxu0 0
    %320 = vmatprep.subr.bf16.mxu0 0
    %321 = vmatpush1.bf16.msra.mxu0 0
    %322 = vmatprep.subr.bf16.mxu0 0
    %323 = vmatpush1.bf16.msra.mxu0 0
    %324 = vmatprep.mubr.bf16.mxu0 0
    %325 = vmatmul.mubr.bf16.gmra.mrb[0].mxu0 %v223
    %v326 = vpop.f32.mrb[0].mxu0
    %v327 = vadd.f32 %v243, %v326
    %v328 = vpop.f32.mrb[0].mxu0
    %v329 = vpop.f32.mrb[0].mxu0
    %v330 = vadd.f32 %v243, %v329
    %v331 = vpop.f32.mrb[0].mxu0
    %332 = vdwg.mxu0
    %v333 = vpack.c.bf16 %v330, %v327
    %v335 = vunpack.c.l.b16 %v333
    %v336 = vunpack.c.h.b16 %v333
    %v337 = vpack.c.b16 %v335, %v335
    %v338 = vpack.c.b16 %v336, %v336
    %341 = vst [vmem:[#allocation10] sm:$0xf] %v337
    %342 = vst [vmem:[#allocation10 + $0x4] sm:$0xf] %v338
    // Predicated region
    $region34: #{tpu_custom_call.1} parent=1 // pred_check
      _
    $region35: #{tpu_custom_call.1} parent=1 // pred_check_branch
      %344 = sbr.rel (0) target = $region37
    $region36: #{tpu_custom_call.1} parent=1 // pred_region
      %s346 = ssub.s32 128, 128
      %347 = vsyncadd [#allocation4], %s346
      %s348 = sshll.u32 [#allocation10], 4
      %s349 = int_to_ptr.vmem [resolvable:$true] %s348
      %354 = dma.vmem_to_hbm [thread:$0]  %s349, 128, %s4, [#allocation4], 64, 64, 4
    $region37: #{tpu_custom_call.1} parent=1 // pred_fallthru
      _
    // Predicated region
    $region38: #{tpu_custom_call.1} parent=1 // pred_check
      _
    $region39: #{tpu_custom_call.1} parent=1 // pred_check_branch
      %356 = sbr.rel (0) target = $region41
    $region40: #{tpu_custom_call.1} parent=1 // pred_region
      %357 = dma.done [#allocation4], 128
    $region41: #{tpu_custom_call.1} parent=1 // pred_fallthru
      _
    %358 = vsyncpa [#allocation3], 1
    %359 = vsyncpa [#allocation6], 1
    %360 = vsyncpa [#allocation9], 1
    %361 = vsyncpa [#allocation4], 1

</llo_original>
